<compile_context>
chip_gen: v5e
topology: v5e:2x2
jax: 0.10.0
libtpu: 0.0.40
codegen_flags: <defaults>
</compile_context>

<pallas_src>
import math
from functools import partial

import jax
import jax.numpy as jnp
from jax.experimental import pallas as pl
from jax.experimental.pallas import tpu as pltpu


# -----------------------------------------------------------------------------
# Warp-matrix construction (single parameter set per call, shared across batch).
# Fully vectorized: dst index is the identity, so only the row (src) index needs
# a broadcasted compare -- pure VPU work, no serialized scatter.
# -----------------------------------------------------------------------------
def _dest_grid(H, W):
    yy, xx = jnp.meshgrid(
        jnp.arange(H, dtype=jnp.float32),
        jnp.arange(W, dtype=jnp.float32),
        indexing="ij",
    )
    return yy.reshape(-1), xx.reshape(-1)


def _bilinear_warp_matrix_T(sy, sx, H, W):
    """Transposed warp matrix M_T of shape (HW_src, HW_dst) with bilinear
    weights and zero fill outside the image, so that out_flat = in_flat @ M_T."""
    HW = H * W
    y0f = jnp.floor(sy)
    x0f = jnp.floor(sx)
    fy = sy - y0f
    fx = sx - x0f
    y0 = y0f.astype(jnp.int32)
    x0 = x0f.astype(jnp.int32)
    row_idx = jax.lax.broadcasted_iota(jnp.int32, (HW, HW), 0)
    M_T = jnp.zeros((HW, HW), jnp.float32)
    for dy, dx in ((0, 0), (0, 1), (1, 0), (1, 1)):
        yy = y0 + dy
        xx = x0 + dx
        wy = fy if dy == 1 else (1.0 - fy)
        wx = fx if dx == 1 else (1.0 - fx)
        valid = (yy >= 0) & (yy < H) & (xx >= 0) & (xx < W)
        src = jnp.where(valid, yy * W + xx, -1)            # -1 never matches
        w = wy * wx * valid.astype(jnp.float32)
        M_T = M_T + (row_idx == src[None, :]).astype(jnp.float32) * w[None, :]
    return M_T


def make_crop_matrix_T(dy, dx, H, W):
    # RandomCrop((H, W), padding=p): zero-pad by p, crop at a random offset ==
    # integer translation by (dy, dx) in [-p, p] with zero fill.
    yy, xx = _dest_grid(H, W)
    return _bilinear_warp_matrix_T(yy + dy, xx + dx, H, W)


def make_rotation_matrix_T(theta, H, W):
    # Rotation by theta about the image center, bilinear interpolation, zero fill.
    # TODO(synk): torchvision's RandomRotation defaults to nearest interpolation;
    # bilinear is used here (matches kornia, used by WaNet/bppattack).
    yy, xx = _dest_grid(H, W)
    cy = (H - 1) / 2.0
    cx = (W - 1) / 2.0
    c = jnp.cos(theta)
    s = jnp.sin(theta)
    xr = xx - cx
    yr = yy - cy
    sx = cx + c * xr + s * yr
    sy = cy - s * xr + c * yr
    return _bilinear_warp_matrix_T(sy, sx, H, W)


def fold_flip_into_matrix_T(m_T, flip, H, W):
    # Composing a horizontal flip AFTER a stage == permuting the columns of its
    # transposed matrix: column (y, x) <- column (y, W-1-x).  No matmul needed.
    HW = H * W
    m_flipped = m_T.reshape(HW, H, W)[:, :, ::-1].reshape(HW, HW)
    return jnp.where(flip, m_flipped, m_T)


# -----------------------------------------------------------------------------
# Pallas kernels: lane-dense (NC, HW) rows times shared (HW, HW) warp matrices
# on the MXU.  One-matrix (pre-composed) and two-matrix (sequential) variants.
# -----------------------------------------------------------------------------
def _warp1_kernel(x_ref, m_ref, o_ref):
    o_ref[...] = jnp.dot(
        x_ref[...], m_ref[...], preferred_element_type=jnp.float32
    ).astype(o_ref.dtype)


def _warp2_kernel(x_ref, m1_ref, m2_ref, o_ref):
    t = jnp.dot(x_ref[...], m1_ref[...], preferred_element_type=jnp.float32)
    o_ref[...] = jnp.dot(
        t.astype(m2_ref.dtype), m2_ref[...], preferred_element_type=jnp.float32
    ).astype(o_ref.dtype)


def _round_up(a, b):
    return ((a + b - 1) // b) * b


def _pick_tm(NC):
    # Larger batches -> larger tiles (amortize the ~0.35 us per-grid-step
    # overhead and the MXU RHS weight push).  For large NC, split into >=2
    # tiles so both v7x TensorCores get balanced work; cap at 1024 rows/tile.
    if NC <= 512:
        return NC
    return min(_round_up(pl.cdiv(NC, 2), 256), 1024)


def apply_warp_kernel(x2d, mats, out_dtype):
    """x2d: (NC, HW) bf16; mats: tuple of 1 or 2 (HW, HW) bf16 transposed warp
    matrices, applied left-to-right: out = (x @ mats[0]) [@ mats[1]]."""
    NC, HW = x2d.shape
    n_mats = len(mats)
    tm = _pick_tm(NC)
    grid = (pl.cdiv(NC, tm),)

    x_bytes = jnp.dtype(x2d.dtype).itemsize
    m_bytes = jnp.dtype(mats[0].dtype).itemsize
    o_bytes = jnp.dtype(out_dtype).itemsize

    cost = pl.CostEstimate(
        flops=2 * n_mats * NC * HW * HW,
        transcendentals=0,
        bytes_accessed=NC * HW * x_bytes
        + n_mats * HW * HW * m_bytes
        + NC * HW * o_bytes,
    )

    # Actual VMEM need + ~25% headroom (stays far under v7x's 64 MiB physical).
    # TODO(synk): the warp-matrix operands are grid-invariant (constant
    # index_map) and could be single-buffered (pl.Buffered(1)) on v7x to halve
    # their footprint; left at the default buffering here.
    need = (
        2 * tm * HW * x_bytes            # double-buffered input rows
        + 2 * n_mats * HW * HW * m_bytes # warp matrices (default buffering)
        + 2 * tm * HW * o_bytes          # double-buffered output rows
        + n_mats * tm * HW * 4           # fp32 matmul intermediates
    )
    vmem_limit = int(min(max(need * 5 // 4 + (1 << 20), 4 << 20), 56 << 20))

    kernel = _warp1_kernel if n_mats == 1 else _warp2_kernel
    row_spec = pl.BlockSpec((tm, HW), lambda i: (i, 0))
    mat_spec = pl.BlockSpec((HW, HW), lambda i: (0, 0))

    return pl.pallas_call(
        kernel,
        out_shape=jax.ShapeDtypeStruct((NC, HW), out_dtype),
        grid_spec=pltpu.PrefetchScalarGridSpec(
            num_scalar_prefetch=0,
            grid=grid,
            in_specs=[row_spec] + [mat_spec] * n_mats,
            out_specs=pl.BlockSpec((tm, HW), lambda i: (i, 0)),
        ),
        compiler_params=pltpu.CompilerParams(
            dimension_semantics=("parallel",),   # row tiles independent
            vmem_limit_bytes=vmem_limit,
        ),
        cost_estimate=cost,
    )(x2d, *mats)


# -----------------------------------------------------------------------------
# Forward pass (PostTensorTransform.forward equivalent).
# -----------------------------------------------------------------------------
@partial(jax.jit,
         static_argnames=("random_crop_padding", "random_rotation_deg", "dataset"))
def post_tensor_transform(x, key, *, random_crop_padding, random_rotation_deg,
                          dataset="cifar10"):
    N, C, H, W = x.shape
    HW = H * W
    NC = N * C
    k_pc, k_pr, k_crop, k_rot, k_flip = jax.random.split(key, 5)

    # ProbTransform gates: Python random.random() per forward call in the
    # reference -> one Bernoulli per call here (shared across the batch).
    apply_crop = jax.random.uniform(k_pc, ()) < 0.8
    apply_rot = jax.random.uniform(k_pr, ()) < 0.5

    # One crop offset per call (torchvision samples one window for the batch).
    offs = jax.random.randint(
        k_crop, (2,), 0, 2 * random_crop_padding + 1) - random_crop_padding
    offs = jnp.where(apply_crop, offs, jnp.zeros_like(offs))
    dy = offs[0].astype(jnp.float32)
    dx = offs[1].astype(jnp.float32)

    # One rotation angle per call, in degrees ~ U(-deg, deg).
    deg = jax.random.uniform(
        k_rot, (), minval=-random_rotation_deg, maxval=random_rotation_deg)
    deg = jnp.where(apply_rot, deg, 0.0)
    theta = deg * (math.pi / 180.0)

    mc_T = make_crop_matrix_T(dy, dx, H, W)        # (HW, HW) f32
    mr_T = make_rotation_matrix_T(theta, H, W)     # (HW, HW) f32

    # RandomHorizontalFlip (cifar10 only): fold into the rotation matrix as a
    # pure column reverse -- exact, no extra matmul.  Non-cifar: skipped
    # entirely at the Python level (static branch).
    if dataset == "cifar10":
        flip = jax.random.uniform(k_flip, ()) < 0.5
        mr_T = fold_flip_into_matrix_T(mr_T, flip, H, W)

    # bf16 halves the dominant DMA/matmul cost; precision loss negligible for
    # data augmentation.
    mc_bf = mc_T.astype(jnp.bfloat16)
    mr_bf = mr_T.astype(jnp.bfloat16)
    x2d = x.reshape(NC, HW).astype(jnp.bfloat16)

    if NC < HW:
        # Sequential application ((x@Mc)@Mr'): 4*NC*HW^2 FLOPs beats composing
        # (2*HW^3 + 2*NC*HW^2) whenever NC < HW.  Exact same zero-fill
        # semantics by associativity.
        out2d = apply_warp_kernel(x2d, (mc_bf, mr_bf), x.dtype)
    else:
        # Large batches: compose once in bf16 (MXU fast path), apply once.
        m_bf = jnp.dot(
            mc_bf, mr_bf, preferred_element_type=jnp.float32
        ).astype(jnp.bfloat16)
        out2d = apply_warp_kernel(x2d, (m_bf,), x.dtype)

    # TODO(synk): if this runs once per tiny training step, stack K calls'
    # parameter sets on a leading grid axis and apply them in one pallas_call
    # to amortize launch/fill overhead.
    return out2d.reshape(N, C, H, W)


if __name__ == "__main__":
    # opt: input_height = input_width = 16, random_crop = 2, random_rotation = 10,
    # dataset = "cifar10"
    N, C, H, W = 2, 4, 16, 16
    key = jax.random.PRNGKey(0)
    k_data, k_aug = jax.random.split(key)
    x = jax.random.normal(k_data, (N, C, H, W), dtype=jnp.float32)

    out = post_tensor_transform(
        x, k_aug, random_crop_padding=2, random_rotation_deg=10.0,
        dataset="cifar10")
    out = jax.block_until_ready(out)

    assert out.shape == (N, C, H, W)
    assert out.dtype == jnp.float32
    assert bool(jnp.all(jnp.isfinite(out)))
    print("KERNEL_OK")
</pallas_src>

<mosaic_0001>
module attributes {stable_mosaic.version = 11 : i64} {
  func.func @_warp2_kernel(%arg0: i32, %arg1: memref<8x256xbf16, #tpu.memory_space<vmem>>, %arg2: memref<256x256xbf16, #tpu.memory_space<vmem>>, %arg3: memref<256x256xbf16, #tpu.memory_space<vmem>>, %arg4: memref<8x256xf32, #tpu.memory_space<vmem>>) attributes {dimension_semantics = [#tpu.dimension_semantics<parallel>], iteration_bounds = array<i64: 1>, scalar_prefetch = 0 : i64, scratch_operands = 0 : i64, tpu.core_type = #tpu.core_type<tc>, window_params = [{transform_indices = @transform_0, window_bounds = array<i64: 8, 256>}, {pipeline_mode = #tpu.pipeline_mode<synchronous>, transform_indices = @transform_1, window_bounds = array<i64: 256, 256>}, {pipeline_mode = #tpu.pipeline_mode<synchronous>, transform_indices = @transform_2, window_bounds = array<i64: 256, 256>}, {transform_indices = @transform_3, window_bounds = array<i64: 8, 256>}]} {
    %c0 = arith.constant 0 : index
    %c0_0 = arith.constant 0 : index
    %0 = vector.load %arg1[%c0, %c0_0] : memref<8x256xbf16, #tpu.memory_space<vmem>>, vector<8x256xbf16>
    %c0_1 = arith.constant 0 : index
    %c0_2 = arith.constant 0 : index
    %1 = vector.load %arg2[%c0_1, %c0_2] : memref<256x256xbf16, #tpu.memory_space<vmem>>, vector<256x256xbf16>
    %cst = arith.constant dense<0.000000e+00> : vector<8x256xf32>
    %2 = tpu.matmul %0, %1, %cst {dimension_numbers = #tpu.dot_dimension_numbers<[1], [0], [0], [1], [0, 0, 1, 1], [], []>} : vector<8x256xbf16>, vector<256x256xbf16>, vector<8x256xf32> -> vector<8x256xf32>
    %3 = arith.truncf %2 : vector<8x256xf32> to vector<8x256xbf16>
    %c0_3 = arith.constant 0 : index
    %c0_4 = arith.constant 0 : index
    %4 = vector.load %arg3[%c0_3, %c0_4] : memref<256x256xbf16, #tpu.memory_space<vmem>>, vector<256x256xbf16>
    %cst_5 = arith.constant dense<0.000000e+00> : vector<8x256xf32>
    %5 = tpu.matmul %3, %4, %cst_5 {dimension_numbers = #tpu.dot_dimension_numbers<[1], [0], [0], [1], [0, 0, 1, 1], [], []>} : vector<8x256xbf16>, vector<256x256xbf16>, vector<8x256xf32> -> vector<8x256xf32>
    %c0_6 = arith.constant 0 : index
    %c0_7 = arith.constant 0 : index
    %6 = vector.load %arg4[%c0_6, %c0_7] : memref<8x256xf32, #tpu.memory_space<vmem>>, vector<8x256xf32>
    tpu.vector_store %arg4[%c0_6, %c0_7], %5 {strides = array<i32>} : memref<8x256xf32, #tpu.memory_space<vmem>>, vector<8x256xf32>,
    return
  }
  func.func @transform_0(%arg0: i32) -> (i32, i32) {
    %c0_i32 = arith.constant 0 : i32
    %c0_i32_0 = arith.constant 0 : i32
    return %arg0, %c0_i32 : i32, i32
  }
  func.func @transform_1(%arg0: i32) -> (i32, i32) {
    %c0_i32 = arith.constant 0 : i32
    %c0_i32_0 = arith.constant 0 : i32
    %c0_i32_1 = arith.constant 0 : i32
    return %c0_i32, %c0_i32_0 : i32, i32
  }
  func.func @transform_2(%arg0: i32) -> (i32, i32) {
    %c0_i32 = arith.constant 0 : i32
    %c0_i32_0 = arith.constant 0 : i32
    %c0_i32_1 = arith.constant 0 : i32
    return %c0_i32, %c0_i32_0 : i32, i32
  }
  func.func @transform_3(%arg0: i32) -> (i32, i32) {
    %c0_i32 = arith.constant 0 : i32
    %c0_i32_0 = arith.constant 0 : i32
    return %arg0, %c0_i32 : i32, i32
  }
}

</mosaic_0001>

<llo_original>
// kernel: post_tensor_transform.3
$region0: #{post_tensor_transform.3}
  #allocation0 [shape = 'u32[]', space=smem, size = 0x4, offset = 0x4, fixed_abs, tag = 'smem constant byte address 0x4 - core index']
  #allocation1 [shape = 'u32[72,128]{1,0:T(1,128)}', space=vmem, size = 0x9000, scoped, tag = 'internal scratch']
  %s0 = inlined_call_operand.vmem [shape: bf16[8,256], index: 0, kind: input, shape index: {}]
  %s1 = inlined_call_operand.vmem [shape: bf16[256,256], index: 1, kind: input, shape index: {}]
  %s2 = inlined_call_operand.vmem [shape: bf16[256,256], index: 2, kind: input, shape index: {}]
  %s3 = inlined_call_operand.vmem [shape: f32[8,256], index: 3, kind: output, shape index: {}]
  %s4 = sld [smem:[#allocation0]]
  $region22: #{post_tensor_transform.3} parent=0
    _
  %s6 = ssub.s32 1, %s4
  %s7 = scalar_select 0, %s6, %s4
  // Predicated region
  $region2: #{post_tensor_transform.3} parent=0 // pred_check
    _
  $region3: #{post_tensor_transform.3} parent=0 // pred_check_branch
    %9 = sbr.rel (0) target = $region5
  $region4: #{post_tensor_transform.3} parent=0 // pred_region
    _
  $region5: #{post_tensor_transform.3} parent=0 // pred_fallthru
    _
  // Predicated region
  $region6: #{post_tensor_transform.3} parent=0 // pred_check
    _
  $region7: #{post_tensor_transform.3} parent=0 // pred_check_branch
    %11 = sbr.rel (0) target = $region9
  $region8: #{post_tensor_transform.3} parent=0 // pred_region
    _
  $region9: #{post_tensor_transform.3} parent=0 // pred_fallthru
    _
  // Predicated region
  $region10: #{post_tensor_transform.3} parent=0 // pred_check
    _
  $region11: #{post_tensor_transform.3} parent=0 // pred_check_branch
    %13 = sbr.rel (0) target = $region13
  $region12: #{post_tensor_transform.3} parent=0 // pred_region
    _
  $region13: #{post_tensor_transform.3} parent=0 // pred_fallthru
    _
  %v14 = vld [vmem:[%s0] sm:$0xff]
  %v15 = vld [vmem:[%s1] sm:$0xff]
  %v16 = vld [vmem:[%s1 + $0x8] sm:$0xff]
  %v17 = vld [vmem:[%s1 + $0x10] sm:$0xff]
  %v18 = vld [vmem:[%s1 + $0x18] sm:$0xff]
  %v19 = vld [vmem:[%s1 + $0x20] sm:$0xff]
  %v20 = vld [vmem:[%s1 + $0x28] sm:$0xff]
  %v21 = vld [vmem:[%s1 + $0x30] sm:$0xff]
  %v22 = vld [vmem:[%s1 + $0x38] sm:$0xff]
  %v23 = vld [vmem:[%s1 + $0x40] sm:$0xff]
  %v24 = vld [vmem:[%s1 + $0x48] sm:$0xff]
  %v25 = vld [vmem:[%s1 + $0x50] sm:$0xff]
  %v26 = vld [vmem:[%s1 + $0x58] sm:$0xff]
  %v27 = vld [vmem:[%s1 + $0x60] sm:$0xff]
  %v28 = vld [vmem:[%s1 + $0x68] sm:$0xff]
  %v29 = vld [vmem:[%s1 + $0x70] sm:$0xff]
  %v30 = vld [vmem:[%s1 + $0x78] sm:$0xff]
  %v31 = vld [vmem:[%s1 + $0x80] sm:$0xff]
  %v32 = vld [vmem:[%s1 + $0x88] sm:$0xff]
  %v33 = vld [vmem:[%s1 + $0x90] sm:$0xff]
  %v34 = vld [vmem:[%s1 + $0x98] sm:$0xff]
  %v35 = vld [vmem:[%s1 + $0xa0] sm:$0xff]
  %v36 = vld [vmem:[%s1 + $0xa8] sm:$0xff]
  %v37 = vld [vmem:[%s1 + $0xb0] sm:$0xff]
  %v38 = vld [vmem:[%s1 + $0xb8] sm:$0xff]
  %v39 = vld [vmem:[%s1 + $0xc0] sm:$0xff]
  %v40 = vld [vmem:[%s1 + $0xc8] sm:$0xff]
  %v41 = vld [vmem:[%s1 + $0xd0] sm:$0xff]
  %v42 = vld [vmem:[%s1 + $0xd8] sm:$0xff]
  %v43 = vld [vmem:[%s1 + $0xe0] sm:$0xff]
  %v44 = vld [vmem:[%s1 + $0xe8] sm:$0xff]
  %v45 = vld [vmem:[%s1 + $0xf0] sm:$0xff]
  %v46 = vld [vmem:[%s1 + $0xf8] sm:$0xff]
  %v48 = vunpack.c.l.b16 %v14
  %v49 = vunpack.c.h.b16 %v14
  %v50 = vpack.c.b16 %v48, %v48
  %v51 = vpack.c.b16 %v49, %v49
  %v86 = vunpack.c.l.b16 %v15
  %v87 = vunpack.c.h.b16 %v15
  %v88 = vunpack.c.l.b16 %v16
  %v89 = vunpack.c.h.b16 %v16
  %v90 = vunpack.c.l.b16 %v17
  %v91 = vunpack.c.h.b16 %v17
  %v92 = vunpack.c.l.b16 %v18
  %v93 = vunpack.c.h.b16 %v18
  %v94 = vunpack.c.l.b16 %v19
  %v95 = vunpack.c.h.b16 %v19
  %v96 = vunpack.c.l.b16 %v20
  %v97 = vunpack.c.h.b16 %v20
  %v98 = vunpack.c.l.b16 %v21
  %v99 = vunpack.c.h.b16 %v21
  %v100 = vunpack.c.l.b16 %v22
  %v101 = vunpack.c.h.b16 %v22
  %v102 = vunpack.c.l.b16 %v23
  %v103 = vunpack.c.h.b16 %v23
  %v104 = vunpack.c.l.b16 %v24
  %v105 = vunpack.c.h.b16 %v24
  %v106 = vunpack.c.l.b16 %v25
  %v107 = vunpack.c.h.b16 %v25
  %v108 = vunpack.c.l.b16 %v26
  %v109 = vunpack.c.h.b16 %v26
  %v110 = vunpack.c.l.b16 %v27
  %v111 = vunpack.c.h.b16 %v27
  %v112 = vunpack.c.l.b16 %v28
  %v113 = vunpack.c.h.b16 %v28
  %v114 = vunpack.c.l.b16 %v29
  %v115 = vunpack.c.h.b16 %v29
  %v116 = vunpack.c.l.b16 %v30
  %v117 = vunpack.c.h.b16 %v30
  %v118 = vunpack.c.l.b16 %v31
  %v119 = vunpack.c.h.b16 %v31
  %v120 = vunpack.c.l.b16 %v32
  %v121 = vunpack.c.h.b16 %v32
  %v122 = vunpack.c.l.b16 %v33
  %v123 = vunpack.c.h.b16 %v33
  %v124 = vunpack.c.l.b16 %v34
  %v125 = vunpack.c.h.b16 %v34
  %v126 = vunpack.c.l.b16 %v35
  %v127 = vunpack.c.h.b16 %v35
  %v128 = vunpack.c.l.b16 %v36
  %v129 = vunpack.c.h.b16 %v36
  %v130 = vunpack.c.l.b16 %v37
  %v131 = vunpack.c.h.b16 %v37
  %v132 = vunpack.c.l.b16 %v38
  %v133 = vunpack.c.h.b16 %v38
  %v134 = vunpack.c.l.b16 %v39
  %v135 = vunpack.c.h.b16 %v39
  %v136 = vunpack.c.l.b16 %v40
  %v137 = vunpack.c.h.b16 %v40
  %v138 = vunpack.c.l.b16 %v41
  %v139 = vunpack.c.h.b16 %v41
  %v140 = vunpack.c.l.b16 %v42
  %v141 = vunpack.c.h.b16 %v42
  %v142 = vunpack.c.l.b16 %v43
  %v143 = vunpack.c.h.b16 %v43
  %v144 = vunpack.c.l.b16 %v44
  %v145 = vunpack.c.h.b16 %v44
  %v146 = vunpack.c.l.b16 %v45
  %v147 = vunpack.c.h.b16 %v45
  %v148 = vunpack.c.l.b16 %v46
  %v149 = vunpack.c.h.b16 %v46
  %v150 = vpack.c.b16 %v88, %v86
  %v151 = vpack.c.b16 %v89, %v87
  %v152 = vpack.c.b16 %v92, %v90
  %v153 = vpack.c.b16 %v93, %v91
  %v154 = vpack.c.b16 %v96, %v94
  %v155 = vpack.c.b16 %v97, %v95
  %v156 = vpack.c.b16 %v100, %v98
  %v157 = vpack.c.b16 %v101, %v99
  %v158 = vpack.c.b16 %v104, %v102
  %v159 = vpack.c.b16 %v105, %v103
  %v160 = vpack.c.b16 %v108, %v106
  %v161 = vpack.c.b16 %v109, %v107
  %v162 = vpack.c.b16 %v112, %v110
  %v163 = vpack.c.b16 %v113, %v111
  %v164 = vpack.c.b16 %v116, %v114
  %v165 = vpack.c.b16 %v117, %v115
  %v166 = vpack.c.b16 %v120, %v118
  %v167 = vpack.c.b16 %v121, %v119
  %v168 = vpack.c.b16 %v124, %v122
  %v169 = vpack.c.b16 %v125, %v123
  %v170 = vpack.c.b16 %v128, %v126
  %v171 = vpack.c.b16 %v129, %v127
  %v172 = vpack.c.b16 %v132, %v130
  %v173 = vpack.c.b16 %v133, %v131
  %v174 = vpack.c.b16 %v136, %v134
  %v175 = vpack.c.b16 %v137, %v135
  %v176 = vpack.c.b16 %v140, %v138
  %v177 = vpack.c.b16 %v141, %v139
  %v178 = vpack.c.b16 %v144, %v142
  %v179 = vpack.c.b16 %v145, %v143
  %v180 = vpack.c.b16 %v148, %v146
  %v181 = vpack.c.b16 %v149, %v147
  %214 = vmatpush.bf16.msra.mxu0 %v164
  %215 = vmatpush.bf16.msra.mxu0 %v162
  %216 = vmatpush.bf16.msra.mxu0 %v160
  %217 = vmatpush.bf16.msra.mxu0 %v158
  %218 = vmatpush.bf16.msra.mxu0 %v156
  %219 = vmatpush.bf16.msra.mxu0 %v154
  %220 = vmatpush.bf16.msra.mxu0 %v152
  %221 = vmatpush.bf16.msra.mxu0 %v150
  %222 = vmatmul.bf16.gmra.mxu0 %v50
  %v223 = vpop.f32.mrf.mxu0
  %v224 = vadd.f32 0.0, %v223
  %v225 = vpop.f32.mrf.mxu0
  %226 = vdwg.mxu0
  %227 = vmatpush.bf16.msra.mxu0 %v180
  %228 = vmatpush.bf16.msra.mxu0 %v178
  %229 = vmatpush.bf16.msra.mxu0 %v176
  %230 = vmatpush.bf16.msra.mxu0 %v174
  %231 = vmatpush.bf16.msra.mxu0 %v172
  %232 = vmatpush.bf16.msra.mxu0 %v170
  %233 = vmatpush.bf16.msra.mxu0 %v168
  %234 = vmatpush.bf16.msra.mxu0 %v166
  %235 = vmatmul.bf16.gmra.mxu0 %v51
  %v236 = vpop.f32.mrf.mxu0
  %v237 = vadd.f32 %v224, %v236
  %v238 = vpop.f32.mrf.mxu0
  %239 = vdwg.mxu0
  %240 = vmatpush.bf16.msra.mxu0 %v165
  %241 = vmatpush.bf16.msra.mxu0 %v163
  %242 = vmatpush.bf16.msra.mxu0 %v161
  %243 = vmatpush.bf16.msra.mxu0 %v159
  %244 = vmatpush.bf16.msra.mxu0 %v157
  %245 = vmatpush.bf16.msra.mxu0 %v155
  %246 = vmatpush.bf16.msra.mxu0 %v153
  %247 = vmatpush.bf16.msra.mxu0 %v151
  %248 = vmatmul.bf16.gmra.mxu0 %v50
  %v249 = vpop.f32.mrf.mxu0
  %v250 = vadd.f32 0.0, %v249
  %v251 = vpop.f32.mrf.mxu0
  %252 = vdwg.mxu0
  %253 = vmatpush.bf16.msra.mxu0 %v181
  %254 = vmatpush.bf16.msra.mxu0 %v179
  %255 = vmatpush.bf16.msra.mxu0 %v177
  %256 = vmatpush.bf16.msra.mxu0 %v175
  %257 = vmatpush.bf16.msra.mxu0 %v173
  %258 = vmatpush.bf16.msra.mxu0 %v171
  %259 = vmatpush.bf16.msra.mxu0 %v169
  %260 = vmatpush.bf16.msra.mxu0 %v167
  %261 = vmatmul.bf16.gmra.mxu0 %v51
  %v262 = vpop.f32.mrf.mxu0
  %v263 = vadd.f32 %v250, %v262
  %v264 = vpop.f32.mrf.mxu0
  %265 = vdwg.mxu0
  %v266 = vpack.c.bf16 %v237, %v237
  %v267 = vpack.c.bf16 %v263, %v263
  %v268 = vld [vmem:[%s2] sm:$0xff]
  %v269 = vld [vmem:[%s2 + $0x8] sm:$0xff]
  %v270 = vld [vmem:[%s2 + $0x10] sm:$0xff]
  %v271 = vld [vmem:[%s2 + $0x18] sm:$0xff]
  %v272 = vld [vmem:[%s2 + $0x20] sm:$0xff]
  %v273 = vld [vmem:[%s2 + $0x28] sm:$0xff]
  %v274 = vld [vmem:[%s2 + $0x30] sm:$0xff]
  %v275 = vld [vmem:[%s2 + $0x38] sm:$0xff]
  %v276 = vld [vmem:[%s2 + $0x40] sm:$0xff]
  %v277 = vld [vmem:[%s2 + $0x48] sm:$0xff]
  %v278 = vld [vmem:[%s2 + $0x50] sm:$0xff]
  %v279 = vld [vmem:[%s2 + $0x58] sm:$0xff]
  %v280 = vld [vmem:[%s2 + $0x60] sm:$0xff]
  %v281 = vld [vmem:[%s2 + $0x68] sm:$0xff]
  %v282 = vld [vmem:[%s2 + $0x70] sm:$0xff]
  %v283 = vld [vmem:[%s2 + $0x78] sm:$0xff]
  %v284 = vld [vmem:[%s2 + $0x80] sm:$0xff]
  %v285 = vld [vmem:[%s2 + $0x88] sm:$0xff]
  %v286 = vld [vmem:[%s2 + $0x90] sm:$0xff]
  %v287 = vld [vmem:[%s2 + $0x98] sm:$0xff]
  %v288 = vld [vmem:[%s2 + $0xa0] sm:$0xff]
  %v289 = vld [vmem:[%s2 + $0xa8] sm:$0xff]
  %v290 = vld [vmem:[%s2 + $0xb0] sm:$0xff]
  %v291 = vld [vmem:[%s2 + $0xb8] sm:$0xff]
  %v292 = vld [vmem:[%s2 + $0xc0] sm:$0xff]
  %v293 = vld [vmem:[%s2 + $0xc8] sm:$0xff]
  %v294 = vld [vmem:[%s2 + $0xd0] sm:$0xff]
  %v295 = vld [vmem:[%s2 + $0xd8] sm:$0xff]
  %v296 = vld [vmem:[%s2 + $0xe0] sm:$0xff]
  %v297 = vld [vmem:[%s2 + $0xe8] sm:$0xff]
  %v298 = vld [vmem:[%s2 + $0xf0] sm:$0xff]
  %v299 = vld [vmem:[%s2 + $0xf8] sm:$0xff]
  %v332 = vunpack.c.l.b16 %v268
  %v333 = vunpack.c.h.b16 %v268
  %v334 = vunpack.c.l.b16 %v269
  %v335 = vunpack.c.h.b16 %v269
  %v336 = vunpack.c.l.b16 %v270
  %v337 = vunpack.c.h.b16 %v270
  %v338 = vunpack.c.l.b16 %v271
  %v339 = vunpack.c.h.b16 %v271
  %v340 = vunpack.c.l.b16 %v272
  %v341 = vunpack.c.h.b16 %v272
  %v342 = vunpack.c.l.b16 %v273
  %v343 = vunpack.c.h.b16 %v273
  %v344 = vunpack.c.l.b16 %v274
  %v345 = vunpack.c.h.b16 %v274
  %v346 = vunpack.c.l.b16 %v275
  %v347 = vunpack.c.h.b16 %v275
  %v348 = vunpack.c.l.b16 %v276
  %v349 = vunpack.c.h.b16 %v276
  %v350 = vunpack.c.l.b16 %v277
  %v351 = vunpack.c.h.b16 %v277
  %v352 = vunpack.c.l.b16 %v278
  %v353 = vunpack.c.h.b16 %v278
  %v354 = vunpack.c.l.b16 %v279
  %v355 = vunpack.c.h.b16 %v279
  %v356 = vunpack.c.l.b16 %v280
  %v357 = vunpack.c.h.b16 %v280
  %v358 = vunpack.c.l.b16 %v281
  %v359 = vunpack.c.h.b16 %v281
  %v360 = vunpack.c.l.b16 %v282
  %v361 = vunpack.c.h.b16 %v282
  %v362 = vunpack.c.l.b16 %v283
  %v363 = vunpack.c.h.b16 %v283
  %v364 = vunpack.c.l.b16 %v284
  %v365 = vunpack.c.h.b16 %v284
  %v366 = vunpack.c.l.b16 %v285
  %v367 = vunpack.c.h.b16 %v285
  %v368 = vunpack.c.l.b16 %v286
  %v369 = vunpack.c.h.b16 %v286
  %v370 = vunpack.c.l.b16 %v287
  %v371 = vunpack.c.h.b16 %v287
  %v372 = vunpack.c.l.b16 %v288
  %v373 = vunpack.c.h.b16 %v288
  %v374 = vunpack.c.l.b16 %v289
  %v375 = vunpack.c.h.b16 %v289
  %v376 = vunpack.c.l.b16 %v290
  %v377 = vunpack.c.h.b16 %v290
  %v378 = vunpack.c.l.b16 %v291
  %v379 = vunpack.c.h.b16 %v291
  %v380 = vunpack.c.l.b16 %v292
  %v381 = vunpack.c.h.b16 %v292
  %v382 = vunpack.c.l.b16 %v293
  %v383 = vunpack.c.h.b16 %v293
  %v384 = vunpack.c.l.b16 %v294
  %v385 = vunpack.c.h.b16 %v294
  %v386 = vunpack.c.l.b16 %v295
  %v387 = vunpack.c.h.b16 %v295
  %v388 = vunpack.c.l.b16 %v296
  %v389 = vunpack.c.h.b16 %v296
  %v390 = vunpack.c.l.b16 %v297
  %v391 = vunpack.c.h.b16 %v297
  %v392 = vunpack.c.l.b16 %v298
  %v393 = vunpack.c.h.b16 %v298
  %v394 = vunpack.c.l.b16 %v299
  %v395 = vunpack.c.h.b16 %v299
  %v396 = vpack.c.b16 %v334, %v332
  %v397 = vpack.c.b16 %v335, %v333
  %v398 = vpack.c.b16 %v338, %v336
  %v399 = vpack.c.b16 %v339, %v337
  %v400 = vpack.c.b16 %v342, %v340
  %v401 = vpack.c.b16 %v343, %v341
  %v402 = vpack.c.b16 %v346, %v344
  %v403 = vpack.c.b16 %v347, %v345
  %v404 = vpack.c.b16 %v350, %v348
  %v405 = vpack.c.b16 %v351, %v349
  %v406 = vpack.c.b16 %v354, %v352
  %v407 = vpack.c.b16 %v355, %v353
  %v408 = vpack.c.b16 %v358, %v356
  %v409 = vpack.c.b16 %v359, %v357
  %v410 = vpack.c.b16 %v362, %v360
  %v411 = vpack.c.b16 %v363, %v361
  %v412 = vpack.c.b16 %v366, %v364
  %v413 = vpack.c.b16 %v367, %v365
  %v414 = vpack.c.b16 %v370, %v368
  %v415 = vpack.c.b16 %v371, %v369
  %v416 = vpack.c.b16 %v374, %v372
  %v417 = vpack.c.b16 %v375, %v373
  %v418 = vpack.c.b16 %v378, %v376
  %v419 = vpack.c.b16 %v379, %v377
  %v420 = vpack.c.b16 %v382, %v380
  %v421 = vpack.c.b16 %v383, %v381
  %v422 = vpack.c.b16 %v386, %v384
  %v423 = vpack.c.b16 %v387, %v385
  %v424 = vpack.c.b16 %v390, %v388
  %v425 = vpack.c.b16 %v391, %v389
  %v426 = vpack.c.b16 %v394, %v392
  %v427 = vpack.c.b16 %v395, %v393
  %460 = vmatpush.bf16.msra.mxu0 %v410
  %461 = vmatpush.bf16.msra.mxu0 %v408
  %462 = vmatpush.bf16.msra.mxu0 %v406
  %463 = vmatpush.bf16.msra.mxu0 %v404
  %464 = vmatpush.bf16.msra.mxu0 %v402
  %465 = vmatpush.bf16.msra.mxu0 %v400
  %466 = vmatpush.bf16.msra.mxu0 %v398
  %467 = vmatpush.bf16.msra.mxu0 %v396
  %468 = vmatmul.bf16.gmra.mxu0 %v266
  %v469 = vpop.f32.mrf.mxu0
  %v470 = vadd.f32 0.0, %v469
  %v471 = vpop.f32.mrf.mxu0
  %472 = vdwg.mxu0
  %473 = vmatpush.bf16.msra.mxu0 %v426
  %474 = vmatpush.bf16.msra.mxu0 %v424
  %475 = vmatpush.bf16.msra.mxu0 %v422
  %476 = vmatpush.bf16.msra.mxu0 %v420
  %477 = vmatpush.bf16.msra.mxu0 %v418
  %478 = vmatpush.bf16.msra.mxu0 %v416
  %479 = vmatpush.bf16.msra.mxu0 %v414
  %480 = vmatpush.bf16.msra.mxu0 %v412
  %481 = vmatmul.bf16.gmra.mxu0 %v267
  %v482 = vpop.f32.mrf.mxu0
  %v483 = vadd.f32 %v470, %v482
  %v484 = vpop.f32.mrf.mxu0
  %485 = vdwg.mxu0
  %486 = vmatpush.bf16.msra.mxu0 %v411
  %487 = vmatpush.bf16.msra.mxu0 %v409
  %488 = vmatpush.bf16.msra.mxu0 %v407
  %489 = vmatpush.bf16.msra.mxu0 %v405
  %490 = vmatpush.bf16.msra.mxu0 %v403
  %491 = vmatpush.bf16.msra.mxu0 %v401
  %492 = vmatpush.bf16.msra.mxu0 %v399
  %493 = vmatpush.bf16.msra.mxu0 %v397
  %494 = vmatmul.bf16.gmra.mxu0 %v266
  %v495 = vpop.f32.mrf.mxu0
  %v496 = vadd.f32 0.0, %v495
  %v497 = vpop.f32.mrf.mxu0
  %498 = vdwg.mxu0
  %499 = vmatpush.bf16.msra.mxu0 %v427
  %500 = vmatpush.bf16.msra.mxu0 %v425
  %501 = vmatpush.bf16.msra.mxu0 %v423
  %502 = vmatpush.bf16.msra.mxu0 %v421
  %503 = vmatpush.bf16.msra.mxu0 %v419
  %504 = vmatpush.bf16.msra.mxu0 %v417
  %505 = vmatpush.bf16.msra.mxu0 %v415
  %506 = vmatpush.bf16.msra.mxu0 %v413
  %507 = vmatmul.bf16.gmra.mxu0 %v267
  %v508 = vpop.f32.mrf.mxu0
  %v509 = vadd.f32 %v496, %v508
  %v510 = vpop.f32.mrf.mxu0
  %511 = vdwg.mxu0
  %512 = vst [vmem:[%s3] sm:$0xff] %v483
  %513 = vst [vmem:[%s3 + $0x8] sm:$0xff] %v509
  // Predicated region
  $region14: #{post_tensor_transform.3} parent=0 // pred_check
    _
  $region15: #{post_tensor_transform.3} parent=0 // pred_check_branch
    %515 = sbr.rel (0) target = $region17
  $region16: #{post_tensor_transform.3} parent=0 // pred_region
    _
  $region17: #{post_tensor_transform.3} parent=0 // pred_fallthru
    _
  // Predicated region
  $region18: #{post_tensor_transform.3} parent=0 // pred_check
    _
  $region19: #{post_tensor_transform.3} parent=0 // pred_check_branch
    %517 = sbr.rel (0) target = $region21
  $region20: #{post_tensor_transform.3} parent=0 // pred_region
    _
  $region21: #{post_tensor_transform.3} parent=0 // pred_fallthru
    _

</llo_original>
